<compile_context>
chip_gen: v5e
topology: v5e:2x2
jax: 0.10.0
libtpu: 0.0.40
codegen_flags: <defaults>
</compile_context>

<pallas_src>
import jax
import jax.numpy as jnp
from jax.experimental import pallas as pl
from jax.experimental.pallas import tpu as pltpu


def _round_up(x, m):
    return (x + m - 1) // m * m


def _linear_kernel(x_ref, w_ref, b_ref, o_ref, acc_ref):
    """One (i, j, k) grid step: acc += x_tile @ w_tile; add bias + store on last k."""
    k = pl.program_id(2)

    @pl.when(k == 0)
    def _():
        acc_ref[...] = jnp.zeros_like(acc_ref)

    acc_ref[...] += jnp.dot(
        x_ref[...], w_ref[...], preferred_element_type=jnp.float32
    )

    @pl.when(k == pl.num_programs(2) - 1)
    def _():
        o_ref[...] = (acc_ref[...] + b_ref[...]).astype(o_ref.dtype)


def linear(x, w_kn, b, *, tm=128, tn=256, tk=512):
    """x: (M, K), w_kn: (K, N) pre-transposed weight, b: (N,) -> (M, N) fp32."""
    M, K = x.shape
    Kw, N = w_kn.shape
    assert K == Kw

    # Shrink tiles to the (8, 128)-aligned padded extents so small problems
    # still satisfy the divisibility rule; big problems keep the full tiles.
    tm = min(tm, _round_up(M, 8))
    tn = min(tn, _round_up(N, 128))
    tk = min(tk, _round_up(K, 128))
    Mp, Np, Kp = _round_up(M, tm), _round_up(N, tn), _round_up(K, tk)

    # bf16 operands for the MXU; zero padding keeps the K reduction exact and
    # padded M/N rows/cols are sliced away after the call.
    xp = jnp.zeros((Mp, Kp), jnp.bfloat16).at[:M, :K].set(x.astype(jnp.bfloat16))
    wp = jnp.zeros((Kp, Np), jnp.bfloat16).at[:K, :N].set(w_kn.astype(jnp.bfloat16))
    bp = jnp.zeros((1, Np), jnp.float32).at[0, :N].set(b.astype(jnp.float32))

    grid = (Mp // tm, Np // tn, Kp // tk)

    out = pl.pallas_call(
        _linear_kernel,
        out_shape=jax.ShapeDtypeStruct((Mp, Np), jnp.float32),
        grid_spec=pltpu.PrefetchScalarGridSpec(
            num_scalar_prefetch=0,
            grid=grid,
            in_specs=[
                pl.BlockSpec((tm, tk), lambda i, j, k: (i, k)),
                pl.BlockSpec((tk, tn), lambda i, j, k: (k, j)),
                pl.BlockSpec((1, tn), lambda i, j, k: (0, j)),
            ],
            out_specs=pl.BlockSpec((tm, tn), lambda i, j, k: (i, j)),
            scratch_shapes=[pltpu.VMEM((tm, tn), jnp.float32)],
        ),
        compiler_params=pltpu.CompilerParams(
            dimension_semantics=("parallel", "parallel", "arbitrary"),
            vmem_limit_bytes=32 * 1024 * 1024,
        ),
    )(xp, wp, bp)
    return out[:M, :N]


def init_params(key, hidden_size, num_classes):
    """nn.Linear-style uniform(-1/sqrt(in), 1/sqrt(in)) init, weight pre-transposed."""
    kw, kb = jax.random.split(key)
    bound = 1.0 / (hidden_size ** 0.5)
    # Stored as (K, N) = (hidden, classes): lane-contiguous for the matmul,
    # no per-call .T materialization in HBM.
    w_kn = jax.random.uniform(
        kw, (hidden_size, num_classes), jnp.float32, -bound, bound
    )
    b = jax.random.uniform(kb, (num_classes,), jnp.float32, -bound, bound)
    return {"w_kn": w_kn, "b": b}


def classification_head(params, feats):
    """feats: (B, hidden_size) -> logits (B, num_classes)."""
    return linear(feats, params["w_kn"], params["b"])


if __name__ == "__main__":
    key = jax.random.PRNGKey(0)
    kx, kp = jax.random.split(key)

    B, HIDDEN, NUM_CLASSES = 2, 32, 10
    feats = jax.random.normal(kx, (B, HIDDEN), dtype=jnp.float32)
    params = init_params(kp, HIDDEN, NUM_CLASSES)

    out = classification_head(params, feats)
    out = jax.block_until_ready(out)
    assert out.shape == (B, NUM_CLASSES), out.shape
    assert bool(jnp.all(jnp.isfinite(out)))

    # Reference check (bf16 operands with fp32 accumulation tolerance).
    ref = feats @ params["w_kn"] + params["b"]
    assert bool(jnp.allclose(out, ref, atol=5e-2, rtol=5e-2))

    print("KERNEL_OK")
</pallas_src>

<mosaic_0001>
module attributes {stable_mosaic.version = 11 : i64} {
  func.func @_linear_kernel(%arg0: i32, %arg1: i32, %arg2: i32, %arg3: memref<8x128xbf16, #tpu.memory_space<vmem>>, %arg4: memref<128x128xbf16, #tpu.memory_space<vmem>>, %arg5: memref<1x128xf32, #tpu.memory_space<vmem>>, %arg6: memref<8x128xf32, #tpu.memory_space<vmem>>, %arg7: memref<8x128xf32, #tpu.memory_space<vmem>>) attributes {dimension_semantics = [#tpu.dimension_semantics<parallel>, #tpu.dimension_semantics<parallel>, #tpu.dimension_semantics<arbitrary>], iteration_bounds = array<i64: 1, 1, 1>, scalar_prefetch = 0 : i64, scratch_operands = 1 : i64, tpu.core_type = #tpu.core_type<tc>, window_params = [{transform_indices = @transform_0, window_bounds = array<i64: 8, 128>}, {transform_indices = @transform_1, window_bounds = array<i64: 128, 128>}, {transform_indices = @transform_2, window_bounds = array<i64: 1, 128>}, {transform_indices = @transform_3, window_bounds = array<i64: 8, 128>}]} {
    %c0_i32 = arith.constant 0 : i32
    %0 = arith.cmpi eq, %arg2, %c0_i32 : i32
    %1 = arith.extui %0 : i1 to i32
    %c0_i32_0 = arith.constant 0 : i32
    %2 = arith.cmpi ne, %1, %c0_i32_0 : i32
    scf.if %2 {
      %cst_10 = arith.constant 0.000000e+00 : f32
      %12 = vector.broadcast %cst_10 : f32 to vector<8x128xf32>
      %c0_11 = arith.constant 0 : index
      %c0_12 = arith.constant 0 : index
      %13 = vector.load %arg7[%c0_11, %c0_12] : memref<8x128xf32, #tpu.memory_space<vmem>>, vector<8x128xf32>
      tpu.vector_store %arg7[%c0_11, %c0_12], %12 {strides = array<i32>} : memref<8x128xf32, #tpu.memory_space<vmem>>, vector<8x128xf32>,
    } else {
    }
    %c0 = arith.constant 0 : index
    %c0_1 = arith.constant 0 : index
    %3 = vector.load %arg7[%c0, %c0_1] : memref<8x128xf32, #tpu.memory_space<vmem>>, vector<8x128xf32>
    %c0_2 = arith.constant 0 : index
    %c0_3 = arith.constant 0 : index
    %4 = vector.load %arg3[%c0_2, %c0_3] : memref<8x128xbf16, #tpu.memory_space<vmem>>, vector<8x128xbf16>
    %c0_4 = arith.constant 0 : index
    %c0_5 = arith.constant 0 : index
    %5 = vector.load %arg4[%c0_4, %c0_5] : memref<128x128xbf16, #tpu.memory_space<vmem>>, vector<128x128xbf16>
    %cst = arith.constant dense<0.000000e+00> : vector<8x128xf32>
    %6 = tpu.matmul %4, %5, %cst {dimension_numbers = #tpu.dot_dimension_numbers<[1], [0], [0], [1], [0, 0, 1, 1], [], []>} : vector<8x128xbf16>, vector<128x128xbf16>, vector<8x128xf32> -> vector<8x128xf32>
    %7 = arith.addf %3, %6 : vector<8x128xf32>
    %c0_6 = arith.constant 0 : index
    %c0_7 = arith.constant 0 : index
    %8 = vector.load %arg7[%c0_6, %c0_7] : memref<8x128xf32, #tpu.memory_space<vmem>>, vector<8x128xf32>
    tpu.vector_store %arg7[%c0_6, %c0_7], %7 {strides = array<i32>} : memref<8x128xf32, #tpu.memory_space<vmem>>, vector<8x128xf32>,
    %c0_i32_8 = arith.constant 0 : i32
    %9 = arith.cmpi eq, %arg2, %c0_i32_8 : i32
    %10 = arith.extui %9 : i1 to i32
    %c0_i32_9 = arith.constant 0 : i32
    %11 = arith.cmpi ne, %10, %c0_i32_9 : i32
    scf.if %11 {
      %c0_10 = arith.constant 0 : index
      %c0_11 = arith.constant 0 : index
      %12 = vector.load %arg7[%c0_10, %c0_11] : memref<8x128xf32, #tpu.memory_space<vmem>>, vector<8x128xf32>
      %c0_12 = arith.constant 0 : index
      %c0_13 = arith.constant 0 : index
      %13 = vector.load %arg5[%c0_12, %c0_13] : memref<1x128xf32, #tpu.memory_space<vmem>>, vector<1x128xf32>
      %14 = vector.broadcast %13 : vector<1x128xf32> to vector<8x128xf32>
      %15 = arith.addf %12, %14 : vector<8x128xf32>
      %c0_14 = arith.constant 0 : index
      %c0_15 = arith.constant 0 : index
      %16 = vector.load %arg6[%c0_14, %c0_15] : memref<8x128xf32, #tpu.memory_space<vmem>>, vector<8x128xf32>
      tpu.vector_store %arg6[%c0_14, %c0_15], %15 {strides = array<i32>} : memref<8x128xf32, #tpu.memory_space<vmem>>, vector<8x128xf32>,
    } else {
    }
    return
  }
  func.func @transform_0(%arg0: i32, %arg1: i32, %arg2: i32) -> (i32, i32) {
    %c0_i32 = arith.constant 0 : i32
    return %arg0, %arg2 : i32, i32
  }
  func.func @transform_1(%arg0: i32, %arg1: i32, %arg2: i32) -> (i32, i32) {
    %c0_i32 = arith.constant 0 : i32
    return %arg2, %arg1 : i32, i32
  }
  func.func @transform_2(%arg0: i32, %arg1: i32, %arg2: i32) -> (i32, i32) {
    %c0_i32 = arith.constant 0 : i32
    %c0_i32_0 = arith.constant 0 : i32
    return %c0_i32, %arg1 : i32, i32
  }
  func.func @transform_3(%arg0: i32, %arg1: i32, %arg2: i32) -> (i32, i32) {
    %c0_i32 = arith.constant 0 : i32
    return %arg0, %arg1 : i32, i32
  }
}

</mosaic_0001>

<llo_original>
// kernel: tpu_custom_call.1
$region0: #{tpu_custom_call.1}
  #allocation0 [shape = 'u32[]', space=smem, size = 0x4, offset = 0x4, fixed_abs, tag = 'smem constant byte address 0x4 - core index']
  #allocation1 [shape = 'u32[72,128]{1,0:T(1,128)}', space=vmem, size = 0x9000, scoped, tag = 'internal scratch']
  #allocation2 [shape = 'f32[8,128]{1,0:T(8,128)}', space=vmem, size = 0x1000, scoped, tag = 'scratch operand']
  %s0 = inlined_call_operand.hbm [shape: bf16[8,128], index: 0, kind: input, shape index: {}]
  %s1 = inlined_call_operand.hbm [shape: bf16[128,128], index: 1, kind: input, shape index: {}]
  %s2 = inlined_call_operand.vmem [shape: f32[1,128], index: 2, kind: input, shape index: {}]
  %s3 = inlined_call_operand.hbm [shape: f32[8,128], index: 3, kind: output, shape index: {}]
  %s4 = sld [smem:[#allocation0]]
  $region38: #{tpu_custom_call.1} parent=0
    _
  %s6 = ssub.s32 1, %s4
  %s7 = scalar_select 0, %s6, %s4
  $region1: #{tpu_custom_call.1} parent=0
    #allocation3 [shape = 'u8[2048]{0}', space=vmem, size = 0x800, scoped, tag = 'input window, operand 0, single buffered']
    #allocation4 [shape = 's32[1]{0}', space=sflag, size = 0x4, scoped, tag = 'scoped memory for tpu_custom_call.1']
    #allocation5 [shape = 's32[1]{0}', space=sflag, size = 0x4, scoped, tag = 'scoped memory for tpu_custom_call.1']
    #allocation6 [shape = 'u8[32768]{0}', space=vmem, size = 0x8000, scoped, tag = 'input window, operand 1, single buffered']
    #allocation7 [shape = 's32[1]{0}', space=sflag, size = 0x4, scoped, tag = 'scoped memory for tpu_custom_call.1']
    #allocation8 [shape = 'u8[4096]{0}', space=vmem, size = 0x1000, scoped, tag = 'output window, operand 0, single buffered']
    %8 = vsyncpa [#allocation4], 0
    %9 = vsyncpa [#allocation7], 0
    %10 = vsyncpa [#allocation5], 0
    // Predicated region
    $region2: #{tpu_custom_call.1} parent=1 // pred_check
      _
    $region3: #{tpu_custom_call.1} parent=1 // pred_check_branch
      %12 = sbr.rel (0) target = $region5
    $region4: #{tpu_custom_call.1} parent=1 // pred_region
      %14 = vsyncadd [#allocation4], 0
      %s16 = sshll.u32 %s0, 4
      %s17 = int_to_ptr.hbm [resolvable:$true] %s16
      %s18 = sshll.u32 [#allocation3], 4
      %s19 = int_to_ptr.vmem [resolvable:$true] %s18
      %21 = dma.hbm_to_vmem [thread:$0]  %s17, 64, %s19, [#allocation4]
    $region5: #{tpu_custom_call.1} parent=1 // pred_fallthru
      _
    // Predicated region
    $region6: #{tpu_custom_call.1} parent=1 // pred_check
      _
    $region7: #{tpu_custom_call.1} parent=1 // pred_check_branch
      %23 = sbr.rel (0) target = $region9
    $region8: #{tpu_custom_call.1} parent=1 // pred_region
      %25 = vsyncadd [#allocation7], 0
      %s26 = sshll.u32 %s1, 4
      %s27 = int_to_ptr.hbm [resolvable:$true] %s26
      %s28 = sshll.u32 [#allocation6], 4
      %s29 = int_to_ptr.vmem [resolvable:$true] %s28
      %34 = dma.hbm_to_vmem [thread:$0]  %s27, 1024, %s29, [#allocation7], 64, 64, 4
    $region9: #{tpu_custom_call.1} parent=1 // pred_fallthru
      _
    // Predicated region
    $region10: #{tpu_custom_call.1} parent=1 // pred_check
      _
    $region11: #{tpu_custom_call.1} parent=1 // pred_check_branch
      %36 = sbr.rel (0) target = $region13
    $region12: #{tpu_custom_call.1} parent=1 // pred_region
      _
    $region13: #{tpu_custom_call.1} parent=1 // pred_fallthru
      _
    // Predicated region
    $region14: #{tpu_custom_call.1} parent=1 // pred_check
      _
    $region15: #{tpu_custom_call.1} parent=1 // pred_check_branch
      %38 = sbr.rel (0) target = $region17
    $region16: #{tpu_custom_call.1} parent=1 // pred_region
      %40 = dma.done [#allocation4], 64
    $region17: #{tpu_custom_call.1} parent=1 // pred_fallthru
      _
    // Predicated region
    $region18: #{tpu_custom_call.1} parent=1 // pred_check
      _
    $region19: #{tpu_custom_call.1} parent=1 // pred_check_branch
      %42 = sbr.rel (0) target = $region21
    $region20: #{tpu_custom_call.1} parent=1 // pred_region
      %44 = dma.done [#allocation7], 1024
    $region21: #{tpu_custom_call.1} parent=1 // pred_fallthru
      _
    %p45 = scmp.eq.s32.totalorder 0, 0
    // Predicated region
    $region22: #{tpu_custom_call.1} parent=1 // pred_check
      %p46 = pneg %p45
    $region23: #{tpu_custom_call.1} parent=1 // pred_check_branch
      %48 = sbr.rel (%p46) target = $region25
    $region24: #{tpu_custom_call.1} parent=1 // pred_region
      %49 = vst [vmem:[#allocation2] sm:$0xff] 0.0
    $region25: #{tpu_custom_call.1} parent=1 // pred_fallthru
      _
    %v50 = vld [vmem:[#allocation2] sm:$0xff]
    %v51 = vld [vmem:[#allocation3] sm:$0xf]
    %v52 = vld [vmem:[#allocation6] sm:$0xf]
    %v53 = vld [vmem:[#allocation6 + $0x4] sm:$0xf]
    %v54 = vld [vmem:[#allocation6 + $0x8] sm:$0xf]
    %v55 = vld [vmem:[#allocation6 + $0xc] sm:$0xf]
    %v56 = vld [vmem:[#allocation6 + $0x10] sm:$0xf]
    %v57 = vld [vmem:[#allocation6 + $0x14] sm:$0xf]
    %v58 = vld [vmem:[#allocation6 + $0x18] sm:$0xf]
    %v59 = vld [vmem:[#allocation6 + $0x1c] sm:$0xf]
    %v60 = vld [vmem:[#allocation6 + $0x20] sm:$0xf]
    %v61 = vld [vmem:[#allocation6 + $0x24] sm:$0xf]
    %v62 = vld [vmem:[#allocation6 + $0x28] sm:$0xf]
    %v63 = vld [vmem:[#allocation6 + $0x2c] sm:$0xf]
    %v64 = vld [vmem:[#allocation6 + $0x30] sm:$0xf]
    %v65 = vld [vmem:[#allocation6 + $0x34] sm:$0xf]
    %v66 = vld [vmem:[#allocation6 + $0x38] sm:$0xf]
    %v67 = vld [vmem:[#allocation6 + $0x3c] sm:$0xf]
    %v84 = vunpack.c.l.b16 %v52
    %v85 = vunpack.c.l.b16 %v53
    %v86 = vunpack.c.l.b16 %v54
    %v87 = vunpack.c.l.b16 %v55
    %v88 = vunpack.c.l.b16 %v56
    %v89 = vunpack.c.l.b16 %v57
    %v90 = vunpack.c.l.b16 %v58
    %v91 = vunpack.c.l.b16 %v59
    %v92 = vunpack.c.l.b16 %v60
    %v93 = vunpack.c.l.b16 %v61
    %v94 = vunpack.c.l.b16 %v62
    %v95 = vunpack.c.l.b16 %v63
    %v96 = vunpack.c.l.b16 %v64
    %v97 = vunpack.c.l.b16 %v65
    %v98 = vunpack.c.l.b16 %v66
    %v99 = vunpack.c.l.b16 %v67
    %v100 = vpack.c.b16 %v85, %v84
    %v101 = vpack.c.b16 %v87, %v86
    %v102 = vpack.c.b16 %v89, %v88
    %v103 = vpack.c.b16 %v91, %v90
    %v104 = vpack.c.b16 %v93, %v92
    %v105 = vpack.c.b16 %v95, %v94
    %v106 = vpack.c.b16 %v97, %v96
    %v107 = vpack.c.b16 %v99, %v98
    %116 = vmatpush.bf16.msra.mxu0 %v107
    %117 = vmatpush.bf16.msra.mxu0 %v106
    %118 = vmatpush.bf16.msra.mxu0 %v105
    %119 = vmatpush.bf16.msra.mxu0 %v104
    %120 = vmatpush.bf16.msra.mxu0 %v103
    %121 = vmatpush.bf16.msra.mxu0 %v102
    %122 = vmatpush.bf16.msra.mxu0 %v101
    %123 = vmatpush.bf16.msra.mxu0 %v100
    %124 = vmatmul.bf16.gmra.mxu0 %v51
    %v125 = vpop.f32.mrf.mxu0
    %v126 = vadd.f32 0.0, %v125
    %v127 = vpop.f32.mrf.mxu0
    %128 = vdwg.mxu0
    %v129 = vadd.f32 %v50, %v126
    %130 = vst [vmem:[#allocation2] sm:$0xff] %v129
    // Predicated region
    $region26: #{tpu_custom_call.1} parent=1 // pred_check
      %p131 = pneg %p45
    $region27: #{tpu_custom_call.1} parent=1 // pred_check_branch
      %133 = sbr.rel (%p131) target = $region29
    $region28: #{tpu_custom_call.1} parent=1 // pred_region
      %v134 = vld [vmem:[#allocation2] sm:$0xff]
      %v135 = vld [vmem:[%s2] sm:$0x1]
      %v137 = vperm.slane %v135, 0
      %v139 = vadd.f32 %v134, %v137
      %140 = vst [vmem:[#allocation8] sm:$0xff] %v139
    $region29: #{tpu_custom_call.1} parent=1 // pred_fallthru
      _
    // Predicated region
    $region30: #{tpu_custom_call.1} parent=1 // pred_check
      _
    $region31: #{tpu_custom_call.1} parent=1 // pred_check_branch
      %142 = sbr.rel (0) target = $region33
    $region32: #{tpu_custom_call.1} parent=1 // pred_region
      %144 = vsyncadd [#allocation5], 0
      %s146 = sshll.u32 [#allocation8], 4
      %s147 = int_to_ptr.vmem [resolvable:$true] %s146
      %s148 = sshll.u32 %s3, 4
      %s149 = int_to_ptr.hbm [resolvable:$true] %s148
      %151 = dma.vmem_to_hbm [thread:$0]  %s147, 128, %s149, [#allocation5]
    $region33: #{tpu_custom_call.1} parent=1 // pred_fallthru
      _
    // Predicated region
    $region34: #{tpu_custom_call.1} parent=1 // pred_check
      _
    $region35: #{tpu_custom_call.1} parent=1 // pred_check_branch
      %153 = sbr.rel (0) target = $region37
    $region36: #{tpu_custom_call.1} parent=1 // pred_region
      %155 = dma.done [#allocation5], 128
    $region37: #{tpu_custom_call.1} parent=1 // pred_fallthru
      _
    %156 = vsyncpa [#allocation4], 1
    %157 = vsyncpa [#allocation7], 1
    %158 = vsyncpa [#allocation5], 1

</llo_original>
